<compile_context>
chip_gen: v7x
topology: tpu7x:2x2x1
jax: 0.10.0
libtpu: 0.0.40
codegen_flags: <defaults>
</compile_context>

<pallas_src>
import functools

import jax
import jax.numpy as jnp
from jax import lax
from jax.experimental import pallas as pl
from jax.experimental.pallas import tpu as pltpu

MARGIN = 2.0
_EPS = 1e-6                              # F.pairwise_distance default eps (added to the difference)
_NC = 2                                  # outer "parallel" grid axis (2 TCs on v7x; harmless elsewhere)
_TARGET_BLOCK_BYTES = 4 * 1024 * 1024    # ~4 MiB per input block (2-8 MiB sweet spot)


def _contrastive_kernel(x1_ref, x2_ref, label_ref, out_ref, acc_ref,
                        *, batch, tile_rows, tiles_per_core, margin):
    c = pl.program_id(0)          # core / outer split index
    i = pl.program_id(1)          # batch-tile index within this split

    @pl.when(i == 0)
    def _init():
        acc_ref[...] = jnp.zeros_like(acc_ref)

    x1 = x1_ref[...].astype(jnp.float32)          # (TB, D)
    x2 = x2_ref[...].astype(jnp.float32)          # (TB, D)
    label = label_ref[...].astype(jnp.float32)    # (TB, 1)

    diff = x1 - x2 + _EPS                                  # torch's eps-on-the-difference
    d2 = jnp.sum(diff * diff, axis=-1, keepdims=True)      # (TB, 1) squared distance
    d = jnp.sqrt(d2)                                       # only needed for the margin term

    pos = (1.0 - label) * d2                               # use d2 directly (no square(sqrt))
    neg = label * jnp.square(jnp.maximum(margin - d, 0.0))

    # Mask rows that belong to batch padding (B not a multiple of NC * TB).
    tile_start = (c * tiles_per_core + i) * tile_rows
    row = lax.broadcasted_iota(jnp.int32, (tile_rows, 1), 0) + tile_start
    contrib = jnp.where(row < batch, pos + neg, 0.0)

    acc_ref[...] += jnp.sum(contrib, axis=(0, 1), keepdims=True)   # (1,1)

    @pl.when(i == pl.num_programs(1) - 1)
    def _finalize():
        # Lane-dense (8,128) output block: partial sum at [0,0], zeros elsewhere.
        r = lax.broadcasted_iota(jnp.int32, (8, 128), 0)
        lane = lax.broadcasted_iota(jnp.int32, (8, 128), 1)
        onehot = ((r == 0) & (lane == 0)).astype(jnp.float32)
        out_ref[...] = onehot * acc_ref[...]


def contrastive_loss(output1, output2, label, *, margin=MARGIN):
    """output1, output2: (B, D); label: (B,) -> scalar f32 loss."""
    B, D = output1.shape
    itemsize = jnp.dtype(output1.dtype).itemsize

    # Batch tile: largest multiple of 8 rows giving ~4 MiB input blocks, capped at the
    # (rounded-up) batch size.
    rows_for_target = max(8, (_TARGET_BLOCK_BYTES // max(D * itemsize, 1)) // 8 * 8)
    b_rounded = ((B + 7) // 8) * 8
    TB = int(min(rows_for_target, b_rounded))
    # TODO(synk): for very large D (block > ~4 MiB even at TB=8) add a D grid axis that
    # accumulates d2 across feature tiles before the sqrt/margin step.

    n_tiles = pl.cdiv(B, TB)
    tiles_per_core = pl.cdiv(n_tiles, _NC)
    B_pad = _NC * tiles_per_core * TB
    pad = B_pad - B

    x1 = jnp.pad(output1, ((0, pad), (0, 0)))
    x2 = jnp.pad(output2, ((0, pad), (0, 0)))
    lab = jnp.pad(label.reshape(B, 1).astype(jnp.float32), ((0, pad), (0, 0)))

    kernel = functools.partial(
        _contrastive_kernel,
        batch=B, tile_rows=TB, tiles_per_core=tiles_per_core, margin=margin)

    row_map = lambda c, i: (c * tiles_per_core + i, 0)

    partials = pl.pallas_call(
        kernel,
        out_shape=jax.ShapeDtypeStruct((_NC * 8, 128), jnp.float32),
        grid_spec=pltpu.PrefetchScalarGridSpec(
            num_scalar_prefetch=0,
            grid=(_NC, tiles_per_core),
            in_specs=[
                pl.BlockSpec((TB, D), row_map),     # output1 tile (native dtype)
                pl.BlockSpec((TB, D), row_map),     # output2 tile (native dtype)
                pl.BlockSpec((TB, 1), row_map),     # label tile
            ],
            out_specs=pl.BlockSpec((8, 128), lambda c, i: (c, 0)),
            scratch_shapes=[pltpu.VMEM((1, 1), jnp.float32)],
        ),
        compiler_params=pltpu.CompilerParams(
            dimension_semantics=("parallel", "arbitrary"),
            vmem_limit_bytes=32 * 1024 * 1024,
        ),
    )(x1, x2, lab)

    return jnp.sum(partials) / B


def _reference(output1, output2, label):
    # Pure-JAX reference (mirrors the PyTorch module exactly).
    diff = output1.astype(jnp.float32) - output2.astype(jnp.float32) + _EPS
    d = jnp.sqrt(jnp.sum(diff * diff, axis=-1))
    pos = (1.0 - label) * jnp.square(d)
    neg = label * jnp.square(jnp.maximum(MARGIN - d, 0.0))
    return jnp.mean(pos + neg)


if __name__ == "__main__":
    key = jax.random.PRNGKey(0)
    k1, k2, k3 = jax.random.split(key, 3)

    B, D = 8, 32
    output1 = jax.random.normal(k1, (B, D), dtype=jnp.float32)
    output2 = jax.random.normal(k2, (B, D), dtype=jnp.float32)
    label = jax.random.bernoulli(k3, 0.5, (B,)).astype(jnp.float32)

    loss = contrastive_loss(output1, output2, label)
    jax.block_until_ready(loss)

    ref = _reference(output1, output2, label)
    assert jnp.allclose(loss, ref, rtol=1e-5, atol=1e-5), (loss, ref)

    print("KERNEL_OK")
</pallas_src>

<mosaic_0001>
module attributes {stable_mosaic.version = 11 : i64} {
  func.func @_contrastive_kernel(%arg0: i32, %arg1: i32, %arg2: memref<8x32xf32, #tpu.memory_space<vmem>>, %arg3: memref<8x32xf32, #tpu.memory_space<vmem>>, %arg4: memref<8x1xf32, #tpu.memory_space<vmem>>, %arg5: memref<8x128xf32, #tpu.memory_space<vmem>>, %arg6: memref<1x1xf32, #tpu.memory_space<vmem>>) attributes {dimension_semantics = [#tpu.dimension_semantics<parallel>, #tpu.dimension_semantics<arbitrary>], iteration_bounds = array<i64: 2, 1>, scalar_prefetch = 0 : i64, scratch_operands = 1 : i64, tpu.core_type = #tpu.core_type<tc>, window_params = [{transform_indices = @transform_0, window_bounds = array<i64: 8, 32>}, {transform_indices = @transform_1, window_bounds = array<i64: 8, 32>}, {transform_indices = @transform_2, window_bounds = array<i64: 8, 1>}, {transform_indices = @transform_3, window_bounds = array<i64: 8, 128>}]} {
    %c0_i32 = arith.constant 0 : i32
    %0 = arith.cmpi eq, %arg1, %c0_i32 : i32
    %1 = arith.extui %0 : i1 to i32
    %c0_i32_0 = arith.constant 0 : i32
    %2 = arith.cmpi ne, %1, %c0_i32_0 : i32
    scf.if %2 {
      %cst_19 = arith.constant 0.000000e+00 : f32
      %44 = vector.broadcast %cst_19 : f32 to vector<1x1xf32>
      %c0_20 = arith.constant 0 : index
      %c0_21 = arith.constant 0 : index
      %45 = vector.load %arg6[%c0_20, %c0_21] : memref<1x1xf32, #tpu.memory_space<vmem>>, vector<1x1xf32>
      tpu.vector_store %arg6[%c0_20, %c0_21], %44 {strides = array<i32>} : memref<1x1xf32, #tpu.memory_space<vmem>>, vector<1x1xf32>,
    } else {
    }
    %c0 = arith.constant 0 : index
    %c0_1 = arith.constant 0 : index
    %3 = vector.load %arg2[%c0, %c0_1] : memref<8x32xf32, #tpu.memory_space<vmem>>, vector<8x32xf32>
    %c0_2 = arith.constant 0 : index
    %c0_3 = arith.constant 0 : index
    %4 = vector.load %arg3[%c0_2, %c0_3] : memref<8x32xf32, #tpu.memory_space<vmem>>, vector<8x32xf32>
    %c0_4 = arith.constant 0 : index
    %c0_5 = arith.constant 0 : index
    %5 = vector.load %arg4[%c0_4, %c0_5] : memref<8x1xf32, #tpu.memory_space<vmem>>, vector<8x1xf32>
    %6 = arith.subf %3, %4 : vector<8x32xf32>
    %cst = arith.constant 9.99999997E-7 : f32
    %7 = vector.broadcast %cst : f32 to vector<8x32xf32>
    %8 = arith.addf %6, %7 : vector<8x32xf32>
    %9 = arith.mulf %8, %8 : vector<8x32xf32>
    %cst_6 = arith.constant dense<0.000000e+00> : vector<8xf32>
    %10 = vector.multi_reduction <add>, %9, %cst_6 [1] : vector<8x32xf32> to vector<8xf32>
    %11 = vector.shape_cast %10 : vector<8xf32> to vector<8x1xf32>
    %12 = math.sqrt %11 : vector<8x1xf32>
    %cst_7 = arith.constant 1.000000e+00 : f32
    %13 = vector.broadcast %cst_7 : f32 to vector<8x1xf32>
    %14 = arith.subf %13, %5 : vector<8x1xf32>
    %15 = arith.mulf %14, %11 : vector<8x1xf32>
    %cst_8 = arith.constant 2.000000e+00 : f32
    %16 = vector.broadcast %cst_8 : f32 to vector<8x1xf32>
    %17 = arith.subf %16, %12 : vector<8x1xf32>
    %cst_9 = arith.constant 0.000000e+00 : f32
    %18 = vector.broadcast %cst_9 : f32 to vector<8x1xf32>
    %19 = arith.maximumf %17, %18 : vector<8x1xf32>
    %20 = arith.mulf %19, %19 : vector<8x1xf32>
    %21 = arith.mulf %5, %20 : vector<8x1xf32>
    %c1_i32 = arith.constant 1 : i32
    %22 = arith.muli %arg0, %c1_i32 : i32
    %23 = arith.addi %22, %arg1 : i32
    %c8_i32 = arith.constant 8 : i32
    %24 = arith.muli %23, %c8_i32 : i32
    %25 = tpu.iota {dimensions = array<i32: 0>} : vector<8x1xi32>
    %26 = vector.broadcast %24 : i32 to vector<8x1xi32>
    %27 = arith.addi %25, %26 : vector<8x1xi32>
    %c8_i32_10 = arith.constant 8 : i32
    %28 = vector.broadcast %c8_i32_10 : i32 to vector<8x1xi32>
    %29 = arith.cmpi slt, %27, %28 : vector<8x1xi32>
    %30 = arith.addf %15, %21 : vector<8x1xf32>
    %cst_11 = arith.constant 0.000000e+00 : f32
    %31 = vector.broadcast %cst_11 : f32 to vector<8x1xf32>
    %32 = arith.select %29, %30, %31 : vector<8x1xi1>, vector<8x1xf32>
    %c0_12 = arith.constant 0 : index
    %c0_13 = arith.constant 0 : index
    %33 = vector.load %arg6[%c0_12, %c0_13] : memref<1x1xf32, #tpu.memory_space<vmem>>, vector<1x1xf32>
    %34 = vector.shape_cast %32 : vector<8x1xf32> to vector<1x8x1xf32>
    %cst_14 = arith.constant dense<0.000000e+00> : vector<1xf32>
    %35 = vector.multi_reduction <add>, %34, %cst_14 [1, 2] : vector<1x8x1xf32> to vector<1xf32>
    %36 = vector.shape_cast %35 : vector<1xf32> to vector<1x1x1xf32>
    %37 = vector.extract %36[0, 0, 0] : f32 from vector<1x1x1xf32>
    %38 = vector.broadcast %37 : f32 to vector<1x1xf32>
    %39 = arith.addf %33, %38 : vector<1x1xf32>
    %c0_15 = arith.constant 0 : index
    %c0_16 = arith.constant 0 : index
    %40 = vector.load %arg6[%c0_15, %c0_16] : memref<1x1xf32, #tpu.memory_space<vmem>>, vector<1x1xf32>
    tpu.vector_store %arg6[%c0_15, %c0_16], %39 {strides = array<i32>} : memref<1x1xf32, #tpu.memory_space<vmem>>, vector<1x1xf32>,
    %c0_i32_17 = arith.constant 0 : i32
    %41 = arith.cmpi eq, %arg1, %c0_i32_17 : i32
    %42 = arith.extui %41 : i1 to i32
    %c0_i32_18 = arith.constant 0 : i32
    %43 = arith.cmpi ne, %42, %c0_i32_18 : i32
    scf.if %43 {
      %44 = tpu.iota {dimensions = array<i32: 0>} : vector<8x128xi32>
      %45 = tpu.iota {dimensions = array<i32: 1>} : vector<8x128xi32>
      %c0_i32_19 = arith.constant 0 : i32
      %46 = vector.broadcast %c0_i32_19 : i32 to vector<8x128xi32>
      %47 = arith.cmpi eq, %44, %46 : vector<8x128xi32>
      %c0_i32_20 = arith.constant 0 : i32
      %48 = vector.broadcast %c0_i32_20 : i32 to vector<8x128xi32>
      %49 = arith.cmpi eq, %45, %48 : vector<8x128xi32>
      %50 = arith.andi %47, %49 : vector<8x128xi1>
      %51 = arith.extui %50 : vector<8x128xi1> to vector<8x128xi32>
      %52 = arith.sitofp %51 : vector<8x128xi32> to vector<8x128xf32>
      %c0_21 = arith.constant 0 : index
      %c0_22 = arith.constant 0 : index
      %53 = vector.load %arg6[%c0_21, %c0_22] : memref<1x1xf32, #tpu.memory_space<vmem>>, vector<1x1xf32>
      %54 = vector.broadcast %53 : vector<1x1xf32> to vector<8x128xf32>
      %55 = arith.mulf %52, %54 : vector<8x128xf32>
      %c0_23 = arith.constant 0 : index
      %c0_24 = arith.constant 0 : index
      %56 = vector.load %arg5[%c0_23, %c0_24] : memref<8x128xf32, #tpu.memory_space<vmem>>, vector<8x128xf32>
      tpu.vector_store %arg5[%c0_23, %c0_24], %55 {strides = array<i32>} : memref<8x128xf32, #tpu.memory_space<vmem>>, vector<8x128xf32>,
    } else {
    }
    return
  }
  func.func @transform_0(%arg0: i32, %arg1: i32) -> (i32, i32) {
    %c1_i32 = arith.constant 1 : i32
    %0 = arith.muli %arg0, %c1_i32 : i32
    %1 = arith.addi %0, %arg1 : i32
    %c0_i32 = arith.constant 0 : i32
    %c0_i32_0 = arith.constant 0 : i32
    return %1, %c0_i32 : i32, i32
  }
  func.func @transform_1(%arg0: i32, %arg1: i32) -> (i32, i32) {
    %c1_i32 = arith.constant 1 : i32
    %0 = arith.muli %arg0, %c1_i32 : i32
    %1 = arith.addi %0, %arg1 : i32
    %c0_i32 = arith.constant 0 : i32
    %c0_i32_0 = arith.constant 0 : i32
    return %1, %c0_i32 : i32, i32
  }
  func.func @transform_2(%arg0: i32, %arg1: i32) -> (i32, i32) {
    %c1_i32 = arith.constant 1 : i32
    %0 = arith.muli %arg0, %c1_i32 : i32
    %1 = arith.addi %0, %arg1 : i32
    %c0_i32 = arith.constant 0 : i32
    %c0_i32_0 = arith.constant 0 : i32
    return %1, %c0_i32 : i32, i32
  }
  func.func @transform_3(%arg0: i32, %arg1: i32) -> (i32, i32) {
    %c0_i32 = arith.constant 0 : i32
    %c0_i32_0 = arith.constant 0 : i32
    return %arg0, %c0_i32 : i32, i32
  }
}

</mosaic_0001>

<llo_original>
// kernel: tpu_custom_call.1
$region0: #{tpu_custom_call.1}
  #allocation0 [shape = 'u32[]', space=smem, size = 0x4, offset = 0x4, fixed_abs, tag = 'smem constant byte address 0x4 - core index']
  #allocation1 [shape = 'u32[144,128]{1,0:T(1,128)}', space=vmem, size = 0x12000, scoped, tag = 'internal scratch']
  #allocation2 [shape = 'f32[1,1]{1,0:T(1,128)}', space=vmem, size = 0x200, scoped, tag = 'scratch operand']
  %s0 = inlined_call_operand.vmem [shape: f32[16,32], index: 0, kind: input, shape index: {}]
  %s1 = inlined_call_operand.hbm [shape: f32[16,32], index: 1, kind: input, shape index: {}]
  %s2 = inlined_call_operand.vmem [shape: f32[16,1], index: 2, kind: input, shape index: {}]
  %s3 = inlined_call_operand.hbm [shape: f32[16,128], index: 3, kind: output, shape index: {}]
  %s4 = sld [smem:[#allocation0]]
  $region57: #{tpu_custom_call.1} parent=0
    _
  %s6 = ssub.s32 1, %s4
  %s7 = scalar_select 0, %s6, %s4
  $region1: #{tpu_custom_call.1} parent=0
    #allocation3 [shape = 'u8[8192]{0}', space=vmem, size = 0x2000, scoped, tag = 'input window, operand 1']
    #allocation4 [shape = 's32[2]{0}', space=sflag, size = 0x8, scoped, tag = 'scoped memory for tpu_custom_call.1']
    #allocation5 [shape = 's32[2]{0}', space=sflag, size = 0x8, scoped, tag = 'scoped memory for tpu_custom_call.1']
    #allocation6 [shape = 'u8[8192]{0}', space=vmem, size = 0x2000, scoped, tag = 'output window, operand 0']
    %8 = vsyncpa [#allocation4], 0
    %s9 = scalar_lea.sflag [#allocation4], 1
    %10 = vsyncpa %s9, 0
    %11 = vsyncpa [#allocation5], 0
    %s12 = scalar_lea.sflag [#allocation5], 1
    %13 = vsyncpa %s12, 0
    loop: start=0, step=1, limit=4
    $region2: #{tpu_custom_call.1} parent=1 // loop_pre_header
      _
    $region3: #{tpu_custom_call.1} parent=1 // loop_header
      %s15 = sphi 0, %s19
      %p16 = scmp.ge.s32.totalorder %s15, 4
      %s22 = sphi 0, %s34
      %s23 = sphi 0, %s30
      %s24 = sphi 0, %s22
      %s25 = sphi 0, %s23
      %s26 = sphi 0, %s24
      %s27 = sphi 0, %s25
      %s39 = sphi 0, %s41
      %s42 = sphi 0, %s39
      %s43 = sphi 0, %s42
      %s59 = sphi 0, %s43
      %s67 = sphi 0, %s69
      %s70 = sphi 0, %s67
      %s71 = sphi 0, %s70
      %s87 = sphi 0, %s71
      %s95 = sphi 0, %s97
      %s98 = sphi 0, %s95
      %s99 = sphi 0, %s98
      %s115 = sphi 0, %s99
      %s121 = sphi 0, %s123
      %s124 = sphi 0, %s121
      %s125 = sphi 0, %s124
      %s141 = sphi 0, %s125
    $region4: #{tpu_custom_call.1} parent=1 // loop_header_branch
      %18 = sbr.rel (%p16) target = $region8
    $region5: #{tpu_custom_call.1} parent=1 // loop_body
      %s20 = ssub.s32 %s15, 1
      %s21 = ssub.s32 %s15, 2
      %s28 = sadd.s32 1, %s23
      %p29 = scmp.ge.s32.totalorder %s28, 1
      %s30 = scalar_select %p29, 0, %s28
      %s31 = sadd.s32 1, %s22
      %s32 = scalar_select %p29, %s31, %s22
      %p33 = scmp.ge.s32.totalorder %s32, 2
      %s34 = scalar_select %p33, 0, %s32
      %s35 = sadd.s32 %s22, %s23
      %s36 = sadd.s32 %s34, %s30
      %s37 = ssub.s32 %s35, %s36
      %p38 = scmp.eq.s32.totalorder %s37, 0
      %s40 = sadd.s32 %s39, 1
      %s41 = scalar_select %p38, %s39, %s40
      %p44 = pneg %p38
      %p45 = scmp.eq.s32.totalorder %s15, 1
      %p46 = por %p44, %p45
      %p47 = scmp.ne.s32.totalorder %s39, %s42
      %p48 = scmp.eq.s32.totalorder %s15, 0
      %p49 = por %p47, %p48
      %p50 = scmp.ne.s32.totalorder %s39, %s42
      %p51 = scmp.eq.s32.totalorder %s20, 1
      %p52 = por %p50, %p51
      %p53 = scmp.ne.s32.totalorder %s42, %s43
      %p54 = scmp.eq.s32.totalorder %s20, 0
      %p55 = por %p53, %p54
      %p56 = scmp.ne.s32.totalorder %s42, %s43
      %p57 = scmp.eq.s32.totalorder %s21, 1
      %p58 = por %p56, %p57
      %p60 = scmp.ne.s32.totalorder %s43, %s59
      %p61 = scmp.eq.s32.totalorder %s21, 0
      %p62 = por %p60, %p61
      %s63 = sadd.s32 %s22, %s23
      %s64 = sadd.s32 %s34, %s30
      %s65 = ssub.s32 %s63, %s64
      %p66 = scmp.eq.s32.totalorder %s65, 0
      %s68 = sadd.s32 %s67, 1
      %s69 = scalar_select %p66, %s67, %s68
      %p72 = pneg %p66
      %p73 = scmp.eq.s32.totalorder %s15, 1
      %p74 = por %p72, %p73
      %p75 = scmp.ne.s32.totalorder %s67, %s70
      %p76 = scmp.eq.s32.totalorder %s15, 0
      %p77 = por %p75, %p76
      %p78 = scmp.ne.s32.totalorder %s67, %s70
      %p79 = scmp.eq.s32.totalorder %s20, 1
      %p80 = por %p78, %p79
      %p81 = scmp.ne.s32.totalorder %s70, %s71
      %p82 = scmp.eq.s32.totalorder %s20, 0
      %p83 = por %p81, %p82
      %p84 = scmp.ne.s32.totalorder %s70, %s71
      %p85 = scmp.eq.s32.totalorder %s21, 1
      %p86 = por %p84, %p85
      %p88 = scmp.ne.s32.totalorder %s71, %s87
      %p89 = scmp.eq.s32.totalorder %s21, 0
      %p90 = por %p88, %p89
      %s91 = sadd.s32 %s22, %s23
      %s92 = sadd.s32 %s34, %s30
      %s93 = ssub.s32 %s91, %s92
      %p94 = scmp.eq.s32.totalorder %s93, 0
      %s96 = sadd.s32 %s95, 1
      %s97 = scalar_select %p94, %s95, %s96
      %p100 = pneg %p94
      %p101 = scmp.eq.s32.totalorder %s15, 1
      %p102 = por %p100, %p101
      %p103 = scmp.ne.s32.totalorder %s95, %s98
      %p104 = scmp.eq.s32.totalorder %s15, 0
      %p105 = por %p103, %p104
      %p106 = scmp.ne.s32.totalorder %s95, %s98
      %p107 = scmp.eq.s32.totalorder %s20, 1
      %p108 = por %p106, %p107
      %p109 = scmp.ne.s32.totalorder %s98, %s99
      %p110 = scmp.eq.s32.totalorder %s20, 0
      %p111 = por %p109, %p110
      %p112 = scmp.ne.s32.totalorder %s98, %s99
      %p113 = scmp.eq.s32.totalorder %s21, 1
      %p114 = por %p112, %p113
      %p116 = scmp.ne.s32.totalorder %s99, %s115
      %p117 = scmp.eq.s32.totalorder %s21, 0
      %p118 = por %p116, %p117
      %s119 = ssub.s32 %s22, %s34
      %p120 = scmp.eq.s32.totalorder %s119, 0
      %s122 = sadd.s32 %s121, 1
      %s123 = scalar_select %p120, %s121, %s122
      %p126 = pneg %p120
      %p127 = scmp.eq.s32.totalorder %s15, 1
      %p128 = por %p126, %p127
      %p129 = scmp.ne.s32.totalorder %s121, %s124
      %p130 = scmp.eq.s32.totalorder %s15, 0
      %p131 = por %p129, %p130
      %p132 = scmp.ne.s32.totalorder %s121, %s124
      %p133 = scmp.eq.s32.totalorder %s20, 1
      %p134 = por %p132, %p133
      %p135 = scmp.ne.s32.totalorder %s124, %s125
      %p136 = scmp.eq.s32.totalorder %s20, 0
      %p137 = por %p135, %p136
      %p138 = scmp.ne.s32.totalorder %s124, %s125
      %p139 = scmp.eq.s32.totalorder %s21, 1
      %p140 = por %p138, %p139
      %p142 = scmp.ne.s32.totalorder %s125, %s141
      %p143 = scmp.eq.s32.totalorder %s21, 0
      %p144 = por %p142, %p143
      %p145 = scmp.le.s32.totalorder 1, %s15
      %p146 = scmp.lt.s32.totalorder %s15, 3
      %p147 = pnand %p145, %p146
      %p148 = pneg %p147
      // Predicated region
      $region9: #{tpu_custom_call.1} parent=5 // pred_check
        _
      $region10: #{tpu_custom_call.1} parent=5 // pred_check_branch
        %150 = sbr.rel (%p147) target = $region12
      $region11: #{tpu_custom_call.1} parent=5 // pred_region
        %s151 = ssub.s32 %s15, 1
      $region12: #{tpu_custom_call.1} parent=5 // pred_fallthru
        _
      %p152 = scmp.lt.s32.totalorder %s15, 2
      // Predicated region
      $region13: #{tpu_custom_call.1} parent=5 // pred_check
        %p153 = pneg %p152
      $region14: #{tpu_custom_call.1} parent=5 // pred_check_branch
        %155 = sbr.rel (%p153) target = $region16
      $region15: #{tpu_custom_call.1} parent=5 // pred_region
        // Predicated region
        $region17: #{tpu_custom_call.1} parent=15 // pred_check
          %p156 = pneg %p49
        $region18: #{tpu_custom_call.1} parent=15 // pred_check_branch
          %158 = sbr.rel (%p156) target = $region20
        $region19: #{tpu_custom_call.1} parent=15 // pred_region
          %s159 = sadd.s32 %s22, %s23
          %p160 = scmp.lt.s32.totalorder %s159, 1
          %s161 = scalar_select %p160, %s159, 1
          %s162 = smul.addr %s161, 8
          %s163 = scalar_lea.vmem %s0, %s162
          %s164 = sadd.s32 %s22, %s23
        $region20: #{tpu_custom_call.1} parent=15 // pred_fallthru
          _
        // Predicated region
        $region21: #{tpu_custom_call.1} parent=15 // pred_check
          %p165 = pneg %p77
        $region22: #{tpu_custom_call.1} parent=15 // pred_check_branch
          %167 = sbr.rel (%p165) target = $region24
        $region23: #{tpu_custom_call.1} parent=15 // pred_region
          %s168 = sand.u32 %s67, 1
          %s169 = scalar_lea.sflag [#allocation4], %s168
          %s170 = sand.u32 %s67, 1
          %s171 = smul.addr %s170, 8
          %s172 = scalar_lea.vmem [#allocation3], %s171
          %s173 = sadd.s32 %s22, %s23
          %s175 = ssub.s32 128, 128
          %176 = vsyncadd %s169, %s175
          %s177 = smul.addr %s173, 128
          %s178 = scalar_lea.hbm %s1, %s177
          %s180 = sshll.u32 %s172, 4
          %s181 = int_to_ptr.vmem [resolvable:$true] %s180
          %183 = dma.hbm_to_vmem [thread:$0]  %s178, 128, %s181, %s169
        $region24: #{tpu_custom_call.1} parent=15 // pred_fallthru
          _
        // Predicated region
        $region25: #{tpu_custom_call.1} parent=15 // pred_check
          %p184 = pneg %p105
        $region26: #{tpu_custom_call.1} parent=15 // pred_check_branch
          %186 = sbr.rel (%p184) target = $region28
        $region27: #{tpu_custom_call.1} parent=15 // pred_region
          %s187 = sadd.s32 %s22, %s23
          %p188 = scmp.lt.s32.totalorder %s187, 1
          %s189 = scalar_select %p188, %s187, 1
          %s190 = smul.addr %s189, 8
          %s191 = scalar_lea.vmem %s2, %s190
          %s192 = sadd.s32 %s22, %s23
        $region28: #{tpu_custom_call.1} parent=15 // pred_fallthru
          _
      $region16: #{tpu_custom_call.1} parent=5 // pred_fallthru
        _
      %p193 = scmp.le.s32.totalorder 1, %s15
      %p194 = scmp.lt.s32.totalorder %s15, 3
      %p195 = pnand %p193, %p194
      %p196 = pneg %p195
      // Predicated region
      $region29: #{tpu_custom_call.1} parent=5 // pred_check
        _
      $region30: #{tpu_custom_call.1} parent=5 // pred_check_branch
        %198 = sbr.rel (%p195) target = $region32
      $region31: #{tpu_custom_call.1} parent=5 // pred_region
        %s199 = ssub.s32 %s15, 1
        %s200 = sand.u32 %s70, 1
        %s201 = scalar_lea.sflag [#allocation4], %s200
        %s202 = sand.u32 %s70, 1
        %s203 = smul.addr %s202, 8
        %s204 = scalar_lea.vmem [#allocation3], %s203
        // Predicated region
        $region33: #{tpu_custom_call.1} parent=31 // pred_check
          %p205 = pneg %p83
        $region34: #{tpu_custom_call.1} parent=31 // pred_check_branch
          %207 = sbr.rel (%p205) target = $region36
        $region35: #{tpu_custom_call.1} parent=31 // pred_region
          %208 = dma.done %s201, 128
        $region36: #{tpu_custom_call.1} parent=31 // pred_fallthru
          _
        %s209 = sadd.s32 %s24, %s25
        %p210 = scmp.lt.s32.totalorder %s209, 1
        %s211 = scalar_select %p210, %s209, 1
        %s212 = smul.addr %s211, 8
        %s213 = scalar_lea.vmem %s0, %s212
        %p214 = pneg %p55
        %p215 = pneg %p52
        %s216 = sand.u32 %s70, 1
        %s217 = scalar_lea.sflag [#allocation4], %s216
        %s218 = sand.u32 %s70, 1
        %s219 = smul.addr %s218, 8
        %s220 = scalar_lea.vmem [#allocation3], %s219
        %p221 = pneg %p83
        %p222 = pneg %p80
        %s223 = sadd.s32 %s24, %s25
        %p224 = scmp.lt.s32.totalorder %s223, 1
        %s225 = scalar_select %p224, %s223, 1
        %s226 = smul.addr %s225, 8
        %s227 = scalar_lea.vmem %s2, %s226
        %p228 = pneg %p111
        %p229 = pneg %p108
        %p230 = pneg %p137
        %p231 = pneg %p134
        %s232 = sand.u32 %s124, 1
        %s233 = scalar_lea.sflag [#allocation5], %s232
        %s234 = sand.u32 %s124, 1
        %s235 = smul.addr %s234, 8
        %s236 = scalar_lea.vmem [#allocation6], %s235
        %s237 = sadd.s32 %s24, %s25
        %p238 = scmp.lt.s32.totalorder %s237, 1
        %s239 = scalar_select %p238, %s237, 1
        %s240 = smul.addr %s239, 8
        %s241 = scalar_lea.vmem %s0, %s240
        %s242 = sadd.s32 %s24, %s25
        %s243 = sadd.s32 %s24, %s25
        %s244 = sadd.s32 %s24, %s25
        %p245 = scmp.lt.s32.totalorder %s244, 1
        %s246 = scalar_select %p245, %s244, 1
        %s247 = smul.addr %s246, 8
        %s248 = scalar_lea.vmem %s2, %s247
        %s249 = sadd.s32 %s24, %s25
        %p250 = scmp.eq.s32.totalorder %s25, 0
        // Predicated region
        $region37: #{tpu_custom_call.1} parent=31 // pred_check
          %p251 = pneg %p250
        $region38: #{tpu_custom_call.1} parent=31 // pred_check_branch
          %253 = sbr.rel (%p251) target = $region40
        $region39: #{tpu_custom_call.1} parent=31 // pred_region
          %vm254 = vcmask 0
          %255 = vst.msk [vmem:[#allocation2] sm:$0x1] %vm254, 0.0
        $region40: #{tpu_custom_call.1} parent=31 // pred_fallthru
          _
        %v256 = vld [vmem:[%s241] sm:$0xff]
        %v257 = vld [vmem:[%s204] sm:$0xff]
        %v258 = vld [vmem:[%s248] sm:$0xff]
        %v259 = vsub.f32 %v256, %v257
        %v260 = vadd.f32 %v259, 1e-06
        %v261 = vmul.f32 %v260, %v260
        %vm262 = vcmask 261120
        %v263 = vsel %vm262, %v261, 0.0
        %264 = vadd.xlane.f32.xlu0 %v263
        %v265 = vpop.xlane.xlu0 %264
        %v266 = vrsqrt.pop %v265
        %v267 = vmul.f32 %v265, %v266
        %vm268 = vcmp.eq.f32.partialorder %v265, inf
        %v269 = vsel %vm268, %v265, %v267
        %vm270 = vcmp.eq.f32.partialorder %v265, 0.0
        %v271 = vand.u32 %v265, 2147483648
        %v272 = vsel %vm270, %v271, %v269
        %v273 = vsub.f32 1.0, %v258
        %v274 = vmul.f32 %v273, %v265
        %v275 = vsub.f32 2.0, %v272
        %v276 = vmax.f32 %v275, 0.0
        %v277 = vmul.f32 %v276, %v276
        %v278 = vmul.f32 %v258, %v277
        %s279 = sadd.s32 %s24, %s25
        %s280 = smul.u32 %s279, 8
        %v281 = vlaneseq
        %v282 = vshrl.u32 %v281, 7
        %v283 = vstv %s280
        %v284 = vadd.s32 %v282, %v283
        %vm285 = vcmp.lt.s32.totalorder %v284, 8
        %v286 = vadd.f32 %v274, %v278
        %v287 = vsel %vm285, %v286, 0.0
        %v288 = vld [vmem:[#allocation2] sm:$0x1]
        %vm289 = vcmask 7168
        %v290 = vsel %vm289, %v287, 0.0
        %291 = vadd.xlane.f32.xlu0 %v290
        %v292 = vpop.xlane.xlu0 %291
        %v293 = vrot.slane %v292, 4
        %v294 = vadd.f32 %v292, %v293
        %v295 = vrot.slane %v294, 2
        %v296 = vadd.f32 %v294, %v295
        %v297 = vrot.slane %v296, 1
        %v298 = vadd.f32 %v296, %v297
        %s299 = vtos %v298
        %v300 = vstv %s299
        %v301 = vadd.f32 %v288, %v300
        %vm302 = vcmask 0
        %303 = vst.msk [vmem:[#allocation2] sm:$0x1] %vm302, %v301
        // Predicated region
        $region41: #{tpu_custom_call.1} parent=31 // pred_check
          %p304 = pneg %p250
        $region42: #{tpu_custom_call.1} parent=31 // pred_check_branch
          %306 = sbr.rel (%p304) target = $region44
        $region43: #{tpu_custom_call.1} parent=31 // pred_region
          %v307 = vlaneseq
          %v308 = vand.u32 %v307, 127
          %vm309 = vcmp.eq.s32.totalorder %v282, 0
          %vm310 = vcmp.eq.s32.totalorder %v308, 0
          %vm311 = vmand %vm309, %vm310
          %v312 = vsel %vm311, 1, 0
          %v313 = vcvt.s32.f32 %v312
          %v314 = vld [vmem:[#allocation2] sm:$0x1]
          %v316 = vlaneseq
          %v317 = vshrl.u32 %v316, 7
          %v318 = vsub.s32 0, %v317
          %v319 = vrot.slane %v314, %v318
          %320 = vset.pattern.permute.xlu0 0
          %321 = vperm.xlu0 %320, %v319
          %v322 = vpop.permute.xlu0 %321
          %v324 = vmul.f32 %v313, %v322
          %325 = vst [vmem:[%s236] sm:$0xff] %v324
        $region44: #{tpu_custom_call.1} parent=31 // pred_fallthru
          _
        %s326 = sand.u32 %s124, 1
        %s327 = scalar_lea.sflag [#allocation5], %s326
        %s328 = sand.u32 %s124, 1
        %s329 = smul.addr %s328, 8
        %s330 = scalar_lea.vmem [#allocation6], %s329
        // Predicated region
        $region45: #{tpu_custom_call.1} parent=31 // pred_check
          %p331 = pneg %p134
        $region46: #{tpu_custom_call.1} parent=31 // pred_check_branch
          %333 = sbr.rel (%p331) target = $region48
        $region47: #{tpu_custom_call.1} parent=31 // pred_region
          %s335 = ssub.s32 128, 128
          %336 = vsyncadd %s327, %s335
          %s337 = smul.addr %s24, 128
          %s338 = scalar_lea.hbm %s3, %s337
          %s340 = sshll.u32 %s330, 4
          %s341 = int_to_ptr.vmem [resolvable:$true] %s340
          %343 = dma.vmem_to_hbm [thread:$0]  %s341, 128, %s338, %s327
        $region48: #{tpu_custom_call.1} parent=31 // pred_fallthru
          _
      $region32: #{tpu_custom_call.1} parent=5 // pred_fallthru
        _
      %p344 = scmp.le.s32.totalorder 2, %s15
      // Predicated region
      $region49: #{tpu_custom_call.1} parent=5 // pred_check
        %p345 = pneg %p344
      $region50: #{tpu_custom_call.1} parent=5 // pred_check_branch
        %347 = sbr.rel (%p345) target = $region52
      $region51: #{tpu_custom_call.1} parent=5 // pred_region
        %s348 = ssub.s32 %s15, 2
        // Predicated region
        $region53: #{tpu_custom_call.1} parent=51 // pred_check
          %p349 = pneg %p140
        $region54: #{tpu_custom_call.1} parent=51 // pred_check_branch
          %351 = sbr.rel (%p349) target = $region56
        $region55: #{tpu_custom_call.1} parent=51 // pred_region
          %s352 = sand.u32 %s125, 1
          %s353 = scalar_lea.sflag [#allocation5], %s352
          %s354 = sand.u32 %s125, 1
          %s355 = smul.addr %s354, 8
          %s356 = scalar_lea.vmem [#allocation6], %s355
          %357 = dma.done %s353, 128
        $region56: #{tpu_custom_call.1} parent=51 // pred_fallthru
          _
      $region52: #{tpu_custom_call.1} parent=5 // pred_fallthru
        _
    $region6: #{tpu_custom_call.1} parent=1 // loop_footer
      %s19 = sadd.s32 1, %s15
    $region7: #{tpu_custom_call.1} parent=1 // loop_footer_branch
      %14 = sbr.rel target = $region3
    $region8: #{tpu_custom_call.1} parent=1 // loop_exit
      _
    %358 = vsyncpa [#allocation4], 1
    %s359 = scalar_lea.sflag [#allocation4], 1
    %360 = vsyncpa %s359, 1
    %361 = vsyncpa [#allocation5], 1
    %s362 = scalar_lea.sflag [#allocation5], 1
    %363 = vsyncpa %s362, 1

</llo_original>
